<compile_context>
chip_gen: v6e
topology: v6e:2x2x1
jax: 0.10.0
libtpu: 0.0.40
codegen_flags: <defaults>
</compile_context>

<pallas_src>
import functools

import jax
import jax.numpy as jnp
from jax.experimental import pallas as pl
from jax.experimental.pallas import tpu as pltpu

_LANE = 128
_SUBLANE = 8

# Flipped to False automatically if pipeline_mode=pl.Buffered(1) is not
# supported by the running JAX build (we then fall back to default buffering).
_SINGLE_BUFFER_WEIGHTS_OK = True


def _round_up(n, m):
    return ((n + m - 1) // m) * m


# ---------------------------------------------------------------------------
# Kernel
# ---------------------------------------------------------------------------
def _fused_qnet_kernel(*refs, num_layers, activations, compute_dtype):
    # refs = (x_ref, w0_ref, b0_ref, w1_ref, b1_ref, ..., o_ref)
    x_ref = refs[0]
    o_ref = refs[-1]
    h = x_ref[...]                                   # (tb, in_pad) f32
    for k in range(num_layers):
        w_ref = refs[1 + 2 * k]                      # (in_k, out_pad_k), lane-dense
        b_ref = refs[2 + 2 * k]                      # (1, out_pad_k), f32
        # bf16 operands (when compute_dtype=bf16), f32 MXU accumulation.
        y = jnp.dot(h.astype(compute_dtype), w_ref[...],
                    preferred_element_type=jnp.float32)
        y = y + b_ref[...]                           # VPU bias add (free slot)
        act = activations[k]
        if act == "relu":
            y = jnp.maximum(y, 0.0)
        elif act == "tanh":
            y = jnp.tanh(y)                          # EUP op (free slot)
        elif act == "sigmoid":
            y = jax.nn.sigmoid(y)
        # "identity": no-op (BaseQNetLayer default)
        h = y                                        # stays in vregs/VMEM
    o_ref[...] = h.astype(o_ref.dtype)


# ---------------------------------------------------------------------------
# One-time parameter preparation
# ---------------------------------------------------------------------------
def prepare_qnet_params(layers, *, weight_dtype=jnp.bfloat16):
    """One-time (init-time) parameter preparation.

    layers: list of (weight [out, in] (PyTorch nn.Linear convention),
                     bias [out], activation in
                     {"identity", "relu", "tanh", "sigmoid"}).

    Transpose, zero-padding to lane-dense [in_pad, out_pad] and the cast to
    `weight_dtype` (bf16 by default -> native MXU throughput, half the VMEM)
    happen here exactly once, NOT per forward call.
    """
    weights_t, biases, acts = [], [], []
    prev_out_f = None
    prev_out_pad = None
    out_f = None
    in0 = None
    in0_pad = None
    for idx, (w, b, act) in enumerate(layers):
        out_f, in_f = w.shape
        if idx == 0:
            in0 = in_f
            in0_pad = _round_up(in_f, _LANE)   # lane-dense first contraction dim
        else:
            assert in_f == prev_out_f, "layer widths must chain"
        out_pad = _round_up(out_f, _LANE)
        # Layer 0 contracts against the (lane-padded) input features; later
        # layers contract against the previous layer's padded output. Zero
        # rows/cols make the padding exact regardless of activation.
        in_dim = in0_pad if idx == 0 else prev_out_pad
        w_t = (jnp.zeros((in_dim, out_pad), jnp.float32)
               .at[:in_f, :out_f].set(w.astype(jnp.float32).T)
               .astype(weight_dtype))
        b_p = jnp.zeros((1, out_pad), jnp.float32).at[0, :out_f].set(
            b.astype(jnp.float32))
        weights_t.append(w_t)
        biases.append(b_p)
        acts.append(act)
        prev_out_f, prev_out_pad = out_f, out_pad
    return {
        "weights_t": tuple(weights_t),
        "biases": tuple(biases),
        "activations": tuple(acts),
        "in_features": in0,
        "in_pad": in0_pad,
        "out_features": out_f,
        "out_pad": prev_out_pad,
    }


# ---------------------------------------------------------------------------
# Tiling / VMEM planning
# ---------------------------------------------------------------------------
def _plan_batch(batch, max_tile=256):
    """Pick (batch_tile, grid_steps, padded_batch)."""
    max_tile = max(_SUBLANE, _round_up(max_tile, _SUBLANE))
    # Large tiles amortize the ~0.35us per-grid-step overhead and fill the
    # 256-wide MXU M dimension on v6e/v7x.
    tb = min(_round_up(batch, _SUBLANE), max_tile)
    if batch >= 16:
        # Guarantee >=2 grid steps so v7x's two TensorCores both get work.
        tb = min(tb, _round_up(pl.cdiv(batch, 2), _SUBLANE))
    grid_n = pl.cdiv(batch, tb)
    # Re-balance: smallest sublane-aligned tile covering the batch in the
    # same number of steps -> minimal row padding, no tile-shrink cliff.
    tb = _round_up(pl.cdiv(batch, grid_n), _SUBLANE)
    return tb, grid_n, tb * grid_n


def _vmem_limit_bytes(tb, in_dim, weights, biases, out_pad, single_buffer,
                      act_itemsize):
    wbuf = 1 if single_buffer else 2
    resident = wbuf * sum(int(a.size) * a.dtype.itemsize
                          for a in (*weights, *biases))
    streamed = 2 * tb * in_dim * act_itemsize + 2 * tb * out_pad * act_itemsize
    widest = max(w.shape[1] for w in weights)
    intermediates = 3 * tb * widest * 4          # f32 intermediates / casts
    est = int(1.5 * (resident + streamed + intermediates)) + (4 << 20)
    # Floor at the default scoped limit; cap at a v7x-physically-safe 64 MiB.
    return max(32 << 20, min(est, 64 << 20))


def _split_into_groups(params, max_resident_bytes):
    """Greedily group consecutive layers so each group's resident weights fit
    the VMEM budget (fallback for wide/deep nets, critical on v7x's 64 MiB)."""
    groups = []
    cur_w, cur_b, cur_a, cur_bytes = [], [], [], 0
    for w, b, a in zip(params["weights_t"], params["biases"],
                       params["activations"]):
        nbytes = int(w.size) * w.dtype.itemsize + int(b.size) * b.dtype.itemsize
        if cur_w and cur_bytes + nbytes > max_resident_bytes:
            groups.append((tuple(cur_w), tuple(cur_b), tuple(cur_a)))
            cur_w, cur_b, cur_a, cur_bytes = [], [], [], 0
        cur_w.append(w)
        cur_b.append(b)
        cur_a.append(a)
        cur_bytes += nbytes
    groups.append((tuple(cur_w), tuple(cur_b), tuple(cur_a)))
    return groups


# ---------------------------------------------------------------------------
# Forward
# ---------------------------------------------------------------------------
def _resident_spec(shape, single_buffer):
    # Constant index_map -> VMEM-resident across the batch grid. Buffered(1)
    # halves the resident footprint (double-buffering a constant is waste).
    if single_buffer:
        return pl.BlockSpec(shape, lambda i: (0, 0), pipeline_mode=pl.Buffered(1))
    return pl.BlockSpec(shape, lambda i: (0, 0))


def _run_group(h, weights, biases, acts, tb, grid_n):
    global _SINGLE_BUFFER_WEIGHTS_OK
    batch_pad, in_dim = h.shape
    out_pad = weights[-1].shape[1]
    kernel = functools.partial(
        _fused_qnet_kernel, num_layers=len(weights), activations=acts,
        compute_dtype=weights[0].dtype)

    def call(single_buffer):
        in_specs = [pl.BlockSpec((tb, in_dim), lambda i: (i, 0))]
        flat_inputs = [h]
        for w_t, b_p in zip(weights, biases):
            in_specs.append(_resident_spec(w_t.shape, single_buffer))
            in_specs.append(_resident_spec(b_p.shape, single_buffer))
            flat_inputs.append(w_t)
            flat_inputs.append(b_p)
        vmem_bytes = _vmem_limit_bytes(tb, in_dim, weights, biases, out_pad,
                                       single_buffer, h.dtype.itemsize)
        return pl.pallas_call(
            kernel,
            out_shape=jax.ShapeDtypeStruct((batch_pad, out_pad), h.dtype),
            grid_spec=pltpu.PrefetchScalarGridSpec(
                num_scalar_prefetch=0,
                grid=(grid_n,),
                in_specs=in_specs,
                out_specs=pl.BlockSpec((tb, out_pad), lambda i: (i, 0)),
            ),
            compiler_params=pltpu.CompilerParams(
                # Batch tiles are independent -> parallel (v7x megacore).
                dimension_semantics=("parallel",),
                vmem_limit_bytes=vmem_bytes,
            ),
        )(*flat_inputs)

    if _SINGLE_BUFFER_WEIGHTS_OK:
        try:
            return call(True)
        except Exception:
            _SINGLE_BUFFER_WEIGHTS_OK = False
    return call(False)


def qnet_forward(x, params, *, return_padded=False, max_batch_tile=256,
                 max_resident_bytes=40 << 20):
    """act_n(... act_0(x @ W_0.T + b_0) ...) fused into as few pallas_calls
    as the VMEM budget allows (normally exactly one).

    If return_padded=True the lane/row-padded slab
    (round_up(batch, tb), round_up(out_features, 128)) is returned, skipping
    one full output HBM round trip; valid data is [:batch, :out_features].
    """
    assert x.ndim == 2, "qnet_forward expects (batch, features)"
    batch, in_f = x.shape
    assert in_f == params["in_features"], "feature width mismatch"
    in_pad = params["in_pad"]

    tb, grid_n, batch_pad = _plan_batch(batch, max_batch_tile)

    # Single cheap pad op: rows to batch_pad, features to the lane-dense
    # in_pad (padded lanes are killed by the zero rows of W_0).
    if (batch_pad, in_pad) != (batch, in_f):
        h = jnp.zeros((batch_pad, in_pad), x.dtype).at[:batch, :in_f].set(x)
    else:
        h = x

    for g_w, g_b, g_a in _split_into_groups(params, max_resident_bytes):
        h = _run_group(h, g_w, g_b, g_a, tb, grid_n)

    if return_padded:
        return h
    return h[:batch, :params["out_features"]]


# ---------------------------------------------------------------------------
# Module-like wrappers (parameters prepared ONCE at construction)
# ---------------------------------------------------------------------------
class QNet:
    """A stack of BaseQNetLayers fused into a single Pallas kernel chain."""

    def __init__(self, layers, *, weight_dtype=jnp.bfloat16):
        self.params = prepare_qnet_params(layers, weight_dtype=weight_dtype)

    def __call__(self, x, *, return_padded=False):
        return qnet_forward(x, self.params, return_padded=return_padded)


class BaseQNetLayer(QNet):
    """Pallas equivalent of the PyTorch BaseQNetLayer (Linear + activation)."""

    def __init__(self, weight, bias, activation="identity", *,
                 weight_dtype=jnp.bfloat16):
        super().__init__([(weight, bias, activation)], weight_dtype=weight_dtype)


def init_params(key, in_features: int, out_features: int):
    """Deterministic init mimicking nn.Linear default (uniform +-1/sqrt(in))."""
    k_w, k_b = jax.random.split(key)
    bound = 1.0 / jnp.sqrt(jnp.float32(in_features))
    weight = jax.random.uniform(
        k_w, (out_features, in_features), jnp.float32, -bound, bound)
    bias = jax.random.uniform(k_b, (out_features,), jnp.float32, -bound, bound)
    return weight, bias


# TODO(synk): arbitrary nn.Module activations are not representable; only
# identity/relu/tanh/sigmoid are mapped in-kernel.
if __name__ == "__main__":
    in_features, out_features, batch = 20, 20, 8
    key = jax.random.PRNGKey(0)
    k_x, k1, k2, k3, k_xb = jax.random.split(key, 5)
    x = jax.random.normal(k_x, (batch, in_features), jnp.float32)

    w1, b1 = init_params(k1, in_features, out_features)
    w2, b2 = init_params(k2, out_features, out_features)
    w3, b3 = init_params(k3, out_features, out_features)

    # --- 1) Single BaseQNetLayer (activation=None -> Identity), exact f32 ---
    layer = BaseQNetLayer(w1, b1, "identity", weight_dtype=jnp.float32)
    out1 = jax.block_until_ready(layer(x))
    ref1 = x @ w1.T + b1
    assert out1.shape == (batch, out_features)
    assert jnp.allclose(out1, ref1, atol=1e-5, rtol=1e-5)

    # Lane-padded fast-path output (no post-kernel slice).
    out1_pad = jax.block_until_ready(layer(x, return_padded=True))
    assert out1_pad.shape[1] % 128 == 0
    assert jnp.allclose(out1_pad[:batch, :out_features], ref1,
                        atol=1e-5, rtol=1e-5)

    # --- 2) Three stacked layers fused into ONE kernel, bf16 weights --------
    stack = [(w1, b1, "relu"), (w2, b2, "relu"), (w3, b3, "identity")]
    net = QNet(stack)  # bf16 weights by default (perf path)

    def bf16_ref(xv):
        h = xv
        for w, b, act in stack:
            y = jnp.dot(h.astype(jnp.bfloat16), w.T.astype(jnp.bfloat16),
                        preferred_element_type=jnp.float32) + b
            if act == "relu":
                y = jnp.maximum(y, 0.0)
            h = y
        return h

    out3 = jax.block_until_ready(net(x))
    ref3 = bf16_ref(x)
    assert out3.shape == (batch, out_features)
    assert jnp.allclose(out3, ref3, atol=1e-2, rtol=1e-2)

    # --- 3) Larger batch: >=2 grid steps + row padding (no tile shrink) -----
    xb = jax.random.normal(k_xb, (260, in_features), jnp.float32)
    outb = jax.block_until_ready(net(xb))
    refb = bf16_ref(xb)
    assert outb.shape == (260, out_features)
    assert jnp.allclose(outb, refb, atol=1e-2, rtol=1e-2)

    # --- 4) Forced chain split (VMEM-budget fallback path) -------------------
    out3_split = jax.block_until_ready(
        qnet_forward(x, net.params, max_resident_bytes=1))
    assert jnp.allclose(out3_split, out3, atol=1e-6, rtol=1e-6)

    print("KERNEL_OK")
</pallas_src>

<mosaic_0001>
module attributes {stable_mosaic.version = 11 : i64} {
  func.func @_fused_qnet_kernel(%arg0: i32, %arg1: memref<8x128xf32, #tpu.memory_space<vmem>>, %arg2: memref<128x128xf32, #tpu.memory_space<vmem>>, %arg3: memref<1x128xf32, #tpu.memory_space<vmem>>, %arg4: memref<8x128xf32, #tpu.memory_space<vmem>>) attributes {dimension_semantics = [#tpu.dimension_semantics<parallel>], iteration_bounds = array<i64: 1>, scalar_prefetch = 0 : i64, scratch_operands = 0 : i64, tpu.core_type = #tpu.core_type<tc>, window_params = [{transform_indices = @transform_0, window_bounds = array<i64: 8, 128>}, {pipeline_mode = #tpu.pipeline_mode<synchronous>, transform_indices = @transform_1, window_bounds = array<i64: 128, 128>}, {pipeline_mode = #tpu.pipeline_mode<synchronous>, transform_indices = @transform_2, window_bounds = array<i64: 1, 128>}, {transform_indices = @transform_3, window_bounds = array<i64: 8, 128>}]} {
    %c0 = arith.constant 0 : index
    %c0_0 = arith.constant 0 : index
    %0 = vector.load %arg1[%c0, %c0_0] : memref<8x128xf32, #tpu.memory_space<vmem>>, vector<8x128xf32>
    %c0_1 = arith.constant 0 : index
    %c0_2 = arith.constant 0 : index
    %1 = vector.load %arg2[%c0_1, %c0_2] : memref<128x128xf32, #tpu.memory_space<vmem>>, vector<128x128xf32>
    %cst = arith.constant dense<0.000000e+00> : vector<8x128xf32>
    %2 = tpu.matmul %0, %1, %cst {dimension_numbers = #tpu.dot_dimension_numbers<[1], [0], [0], [1], [0, 0, 1, 1], [], []>} : vector<8x128xf32>, vector<128x128xf32>, vector<8x128xf32> -> vector<8x128xf32>
    %c0_3 = arith.constant 0 : index
    %c0_4 = arith.constant 0 : index
    %3 = vector.load %arg3[%c0_3, %c0_4] : memref<1x128xf32, #tpu.memory_space<vmem>>, vector<1x128xf32>
    %4 = vector.broadcast %3 : vector<1x128xf32> to vector<8x128xf32>
    %5 = arith.addf %2, %4 : vector<8x128xf32>
    %c0_5 = arith.constant 0 : index
    %c0_6 = arith.constant 0 : index
    %6 = vector.load %arg4[%c0_5, %c0_6] : memref<8x128xf32, #tpu.memory_space<vmem>>, vector<8x128xf32>
    tpu.vector_store %arg4[%c0_5, %c0_6], %5 {strides = array<i32>} : memref<8x128xf32, #tpu.memory_space<vmem>>, vector<8x128xf32>,
    return
  }
  func.func @transform_0(%arg0: i32) -> (i32, i32) {
    %c0_i32 = arith.constant 0 : i32
    %c0_i32_0 = arith.constant 0 : i32
    return %arg0, %c0_i32 : i32, i32
  }
  func.func @transform_1(%arg0: i32) -> (i32, i32) {
    %c0_i32 = arith.constant 0 : i32
    %c0_i32_0 = arith.constant 0 : i32
    %c0_i32_1 = arith.constant 0 : i32
    return %c0_i32, %c0_i32_0 : i32, i32
  }
  func.func @transform_2(%arg0: i32) -> (i32, i32) {
    %c0_i32 = arith.constant 0 : i32
    %c0_i32_0 = arith.constant 0 : i32
    %c0_i32_1 = arith.constant 0 : i32
    return %c0_i32, %c0_i32_0 : i32, i32
  }
  func.func @transform_3(%arg0: i32) -> (i32, i32) {
    %c0_i32 = arith.constant 0 : i32
    %c0_i32_0 = arith.constant 0 : i32
    return %arg0, %c0_i32 : i32, i32
  }
}

module attributes {stable_mosaic.version = 11 : i64} {
  func.func @_fused_qnet_kernel(%arg0: i32, %arg1: memref<8x128xf32, #tpu.memory_space<vmem>>, %arg2: memref<128x128xf32, #tpu.memory_space<vmem>>, %arg3: memref<1x128xf32, #tpu.memory_space<vmem>>, %arg4: memref<8x128xf32, #tpu.memory_space<vmem>>) attributes {dimension_semantics = [#tpu.dimension_semantics<parallel>], iteration_bounds = array<i64: 1>, scalar_prefetch = 0 : i64, scratch_operands = 0 : i64, tpu.core_type = #tpu.core_type<tc>, window_params = [{transform_indices = @transform_0, window_bounds = array<i64: 8, 128>}, {pipeline_mode = #tpu.pipeline_mode<synchronous>, transform_indices = @transform_1, window_bounds = array<i64: 128, 128>}, {pipeline_mode = #tpu.pipeline_mode<synchronous>, transform_indices = @transform_2, window_bounds = array<i64: 1, 128>}, {transform_indices = @transform_3, window_bounds = array<i64: 8, 128>}]} {
    %c0 = arith.constant 0 : index
    %c0_0 = arith.constant 0 : index
    %0 = vector.load %arg1[%c0, %c0_0] : memref<8x128xf32, #tpu.memory_space<vmem>>, vector<8x128xf32>
    %c0_1 = arith.constant 0 : index
    %c0_2 = arith.constant 0 : index
    %1 = vector.load %arg2[%c0_1, %c0_2] : memref<128x128xf32, #tpu.memory_space<vmem>>, vector<128x128xf32>
    %cst = arith.constant dense<0.000000e+00> : vector<8x128xf32>
    %2 = tpu.matmul %0, %1, %cst {dimension_numbers = #tpu.dot_dimension_numbers<[1], [0], [0], [1], [0, 0, 1, 1], [], []>} : vector<8x128xf32>, vector<128x128xf32>, vector<8x128xf32> -> vector<8x128xf32>
    %c0_3 = arith.constant 0 : index
    %c0_4 = arith.constant 0 : index
    %3 = vector.load %arg3[%c0_3, %c0_4] : memref<1x128xf32, #tpu.memory_space<vmem>>, vector<1x128xf32>
    %4 = vector.broadcast %3 : vector<1x128xf32> to vector<8x128xf32>
    %5 = arith.addf %2, %4 : vector<8x128xf32>
    %c0_5 = arith.constant 0 : index
    %c0_6 = arith.constant 0 : index
    %6 = vector.load %arg4[%c0_5, %c0_6] : memref<8x128xf32, #tpu.memory_space<vmem>>, vector<8x128xf32>
    tpu.vector_store %arg4[%c0_5, %c0_6], %5 {strides = array<i32>} : memref<8x128xf32, #tpu.memory_space<vmem>>, vector<8x128xf32>,
    return
  }
  func.func @transform_0(%arg0: i32) -> (i32, i32) {
    %c0_i32 = arith.constant 0 : i32
    %c0_i32_0 = arith.constant 0 : i32
    return %arg0, %c0_i32 : i32, i32
  }
  func.func @transform_1(%arg0: i32) -> (i32, i32) {
    %c0_i32 = arith.constant 0 : i32
    %c0_i32_0 = arith.constant 0 : i32
    %c0_i32_1 = arith.constant 0 : i32
    return %c0_i32, %c0_i32_0 : i32, i32
  }
  func.func @transform_2(%arg0: i32) -> (i32, i32) {
    %c0_i32 = arith.constant 0 : i32
    %c0_i32_0 = arith.constant 0 : i32
    %c0_i32_1 = arith.constant 0 : i32
    return %c0_i32, %c0_i32_0 : i32, i32
  }
  func.func @transform_3(%arg0: i32) -> (i32, i32) {
    %c0_i32 = arith.constant 0 : i32
    %c0_i32_0 = arith.constant 0 : i32
    return %arg0, %c0_i32 : i32, i32
  }
}

</mosaic_0001>

<llo_original>
// kernel: tpu_custom_call.1
$region0: #{tpu_custom_call.1}
  #allocation0 [shape = 'u32[]', space=smem, size = 0x4, offset = 0x4, fixed_abs, tag = 'smem constant byte address 0x4 - core index']
  #allocation1 [shape = 'u32[144,128]{1,0:T(1,128)}', space=vmem, size = 0x12000, scoped, tag = 'internal scratch']
  %s0 = inlined_call_operand.hbm [shape: f32[8,128], index: 0, kind: input, shape index: {}]
  %s1 = inlined_call_operand.hbm [shape: f32[128,128], index: 1, kind: input, shape index: {}]
  %s2 = inlined_call_operand.vmem [shape: f32[1,128], index: 2, kind: input, shape index: {}]
  %s3 = inlined_call_operand.hbm [shape: f32[8,128], index: 3, kind: output, shape index: {}]
  %s4 = sld [smem:[#allocation0]]
  $region30: #{tpu_custom_call.1} parent=0
    _
  %s6 = ssub.s32 1, %s4
  %s7 = scalar_select 0, %s6, %s4
  $region1: #{tpu_custom_call.1} parent=0
    #allocation2 [shape = 'u8[4096]{0}', space=vmem, size = 0x1000, scoped, tag = 'input window, operand 0, single buffered']
    #allocation3 [shape = 's32[1]{0}', space=sflag, size = 0x4, scoped, tag = 'scoped memory for tpu_custom_call.1']
    #allocation4 [shape = 's32[1]{0}', space=sflag, size = 0x4, scoped, tag = 'scoped memory for tpu_custom_call.1']
    #allocation5 [shape = 'u8[65536]{0}', space=vmem, size = 0x10000, scoped, tag = 'input window, operand 1, single buffered']
    #allocation6 [shape = 's32[1]{0}', space=sflag, size = 0x4, scoped, tag = 'scoped memory for tpu_custom_call.1']
    #allocation7 [shape = 'u8[4096]{0}', space=vmem, size = 0x1000, scoped, tag = 'output window, operand 0, single buffered']
    %8 = vsyncpa [#allocation3], 0
    %9 = vsyncpa [#allocation6], 0
    %10 = vsyncpa [#allocation4], 0
    // Predicated region
    $region2: #{tpu_custom_call.1} parent=1 // pred_check
      _
    $region3: #{tpu_custom_call.1} parent=1 // pred_check_branch
      %12 = sbr.rel (0) target = $region5
    $region4: #{tpu_custom_call.1} parent=1 // pred_region
      %s14 = ssub.s32 128, 128
      %15 = vsyncadd [#allocation3], %s14
      %s17 = sshll.u32 [#allocation2], 4
      %s18 = int_to_ptr.vmem [resolvable:$true] %s17
      %20 = dma.hbm_to_vmem [thread:$0]  %s0, 128, %s18, [#allocation3]
    $region5: #{tpu_custom_call.1} parent=1 // pred_fallthru
      _
    // Predicated region
    $region6: #{tpu_custom_call.1} parent=1 // pred_check
      _
    $region7: #{tpu_custom_call.1} parent=1 // pred_check_branch
      %22 = sbr.rel (0) target = $region9
    $region8: #{tpu_custom_call.1} parent=1 // pred_region
      %s24 = ssub.s32 2048, 2048
      %25 = vsyncadd [#allocation6], %s24
      %s26 = sshll.u32 [#allocation5], 4
      %s27 = int_to_ptr.vmem [resolvable:$true] %s26
      %32 = dma.hbm_to_vmem [thread:$0]  %s1, 2048, %s27, [#allocation6], 128, 128, 8
    $region9: #{tpu_custom_call.1} parent=1 // pred_fallthru
      _
    // Predicated region
    $region10: #{tpu_custom_call.1} parent=1 // pred_check
      _
    $region11: #{tpu_custom_call.1} parent=1 // pred_check_branch
      %34 = sbr.rel (0) target = $region13
    $region12: #{tpu_custom_call.1} parent=1 // pred_region
      _
    $region13: #{tpu_custom_call.1} parent=1 // pred_fallthru
      _
    // Predicated region
    $region14: #{tpu_custom_call.1} parent=1 // pred_check
      _
    $region15: #{tpu_custom_call.1} parent=1 // pred_check_branch
      %36 = sbr.rel (0) target = $region17
    $region16: #{tpu_custom_call.1} parent=1 // pred_region
      %37 = dma.done [#allocation3], 128
    $region17: #{tpu_custom_call.1} parent=1 // pred_fallthru
      _
    // Predicated region
    $region18: #{tpu_custom_call.1} parent=1 // pred_check
      _
    $region19: #{tpu_custom_call.1} parent=1 // pred_check_branch
      %39 = sbr.rel (0) target = $region21
    $region20: #{tpu_custom_call.1} parent=1 // pred_region
      %40 = dma.done [#allocation6], 2048
    $region21: #{tpu_custom_call.1} parent=1 // pred_fallthru
      _
    %v41 = vld [vmem:[#allocation2] sm:$0xff]
    %v42 = vld [vmem:[#allocation5] sm:$0xff]
    %v43 = vld [vmem:[#allocation5 + $0x8] sm:$0xff]
    %v44 = vld [vmem:[#allocation5 + $0x10] sm:$0xff]
    %v45 = vld [vmem:[#allocation5 + $0x18] sm:$0xff]
    %v46 = vld [vmem:[#allocation5 + $0x20] sm:$0xff]
    %v47 = vld [vmem:[#allocation5 + $0x28] sm:$0xff]
    %v48 = vld [vmem:[#allocation5 + $0x30] sm:$0xff]
    %v49 = vld [vmem:[#allocation5 + $0x38] sm:$0xff]
    %v50 = vld [vmem:[#allocation5 + $0x40] sm:$0xff]
    %v51 = vld [vmem:[#allocation5 + $0x48] sm:$0xff]
    %v52 = vld [vmem:[#allocation5 + $0x50] sm:$0xff]
    %v53 = vld [vmem:[#allocation5 + $0x58] sm:$0xff]
    %v54 = vld [vmem:[#allocation5 + $0x60] sm:$0xff]
    %v55 = vld [vmem:[#allocation5 + $0x68] sm:$0xff]
    %v56 = vld [vmem:[#allocation5 + $0x70] sm:$0xff]
    %v57 = vld [vmem:[#allocation5 + $0x78] sm:$0xff]
    %v58 = vld [vmem:[%s2] sm:$0x1]
    %v60 = vlaneseq
    %v61 = vshrl.u32 %v60, 7
    %v62 = vsub.s32 0, %v61
    %v63 = vrot.slane %v58, %v62
    %65 = vmatprep.subr.mxu0 0.0
    %66 = vmatpush1.msra.mxu0 %v57
    %67 = vmatprep.subr.mxu0 0.0
    %68 = vmatpush1.msra.mxu0 %v56
    %69 = vmatprep.subr.mxu0 0.0
    %70 = vmatpush1.msra.mxu0 %v55
    %71 = vmatprep.subr.mxu0 0.0
    %72 = vmatpush1.msra.mxu0 %v54
    %73 = vmatprep.subr.mxu0 0.0
    %74 = vmatpush1.msra.mxu0 %v53
    %75 = vmatprep.subr.mxu0 0.0
    %76 = vmatpush1.msra.mxu0 %v52
    %77 = vmatprep.subr.mxu0 0.0
    %78 = vmatpush1.msra.mxu0 %v51
    %79 = vmatprep.subr.mxu0 0.0
    %80 = vmatpush1.msra.mxu0 %v50
    %81 = vmatprep.subr.mxu0 0.0
    %82 = vmatpush1.msra.mxu0 %v49
    %83 = vmatprep.subr.mxu0 0.0
    %84 = vmatpush1.msra.mxu0 %v48
    %85 = vmatprep.subr.mxu0 0.0
    %86 = vmatpush1.msra.mxu0 %v47
    %87 = vmatprep.subr.mxu0 0.0
    %88 = vmatpush1.msra.mxu0 %v46
    %89 = vmatprep.subr.mxu0 0.0
    %90 = vmatpush1.msra.mxu0 %v45
    %91 = vmatprep.subr.mxu0 0.0
    %92 = vmatpush1.msra.mxu0 %v44
    %93 = vmatprep.subr.mxu0 0.0
    %94 = vmatpush1.msra.mxu0 %v43
    %95 = vmatprep.subr.mxu0 0.0
    %96 = vmatpush1.msra.mxu0 %v42
    %97 = vmatprep.subr.mxu0 0.0
    %98 = vmatpush2.msra.mxu0 0.0
    %99 = vmatprep.subr.mxu0 0.0
    %100 = vmatpush2.msra.mxu0 0.0
    %101 = vmatprep.subr.mxu0 0.0
    %102 = vmatpush2.msra.mxu0 0.0
    %103 = vmatprep.subr.mxu0 0.0
    %104 = vmatpush2.msra.mxu0 0.0
    %105 = vmatprep.subr.mxu0 0.0
    %106 = vmatpush2.msra.mxu0 0.0
    %107 = vmatprep.subr.mxu0 0.0
    %108 = vmatpush2.msra.mxu0 0.0
    %109 = vmatprep.subr.mxu0 0.0
    %110 = vmatpush2.msra.mxu0 0.0
    %111 = vmatprep.subr.mxu0 0.0
    %112 = vmatpush2.msra.mxu0 0.0
    %113 = vmatprep.subr.mxu0 0.0
    %114 = vmatpush2.msra.mxu0 0.0
    %115 = vmatprep.subr.mxu0 0.0
    %116 = vmatpush2.msra.mxu0 0.0
    %117 = vmatprep.subr.mxu0 0.0
    %118 = vmatpush2.msra.mxu0 0.0
    %119 = vmatprep.subr.mxu0 0.0
    %120 = vmatpush2.msra.mxu0 0.0
    %121 = vmatprep.subr.mxu0 0.0
    %122 = vmatpush2.msra.mxu0 0.0
    %123 = vmatprep.subr.mxu0 0.0
    %124 = vmatpush2.msra.mxu0 0.0
    %125 = vmatprep.subr.mxu0 0.0
    %126 = vmatpush2.msra.mxu0 0.0
    %127 = vmatprep.subr.mxu0 0.0
    %128 = vmatpush2.msra.mxu0 0.0
    %129 = vmatprep.mubr.f32.mxu0 0.0
    %130 = vmatmul.mubr.f32.gmra.mxu0 %v41
    %v131 = vpop.f32.mrf.mxu0
    %v132 = vadd.f32 %v63, %v131
    %v133 = vpop.f32.mrf.mxu0
    %134 = vdwg.mxu0
    %135 = vst [vmem:[#allocation7] sm:$0xff] %v132
    // Predicated region
    $region22: #{tpu_custom_call.1} parent=1 // pred_check
      _
    $region23: #{tpu_custom_call.1} parent=1 // pred_check_branch
      %137 = sbr.rel (0) target = $region25
    $region24: #{tpu_custom_call.1} parent=1 // pred_region
      %s139 = ssub.s32 128, 128
      %140 = vsyncadd [#allocation4], %s139
      %s142 = sshll.u32 [#allocation7], 4
      %s143 = int_to_ptr.vmem [resolvable:$true] %s142
      %145 = dma.vmem_to_hbm [thread:$0]  %s143, 128, %s3, [#allocation4]
    $region25: #{tpu_custom_call.1} parent=1 // pred_fallthru
      _
    // Predicated region
    $region26: #{tpu_custom_call.1} parent=1 // pred_check
      _
    $region27: #{tpu_custom_call.1} parent=1 // pred_check_branch
      %147 = sbr.rel (0) target = $region29
    $region28: #{tpu_custom_call.1} parent=1 // pred_region
      %148 = dma.done [#allocation4], 128
    $region29: #{tpu_custom_call.1} parent=1 // pred_fallthru
      _
    %149 = vsyncpa [#allocation3], 1
    %150 = vsyncpa [#allocation6], 1
    %151 = vsyncpa [#allocation4], 1

// kernel: tpu_custom_call.1
$region0: #{tpu_custom_call.1}
  #allocation0 [shape = 'u32[]', space=smem, size = 0x4, offset = 0x4, fixed_abs, tag = 'smem constant byte address 0x4 - core index']
  #allocation1 [shape = 'u32[144,128]{1,0:T(1,128)}', space=vmem, size = 0x12000, scoped, tag = 'internal scratch']
  %s0 = inlined_call_operand.hbm [shape: f32[8,128], index: 0, kind: input, shape index: {}]
  %s1 = inlined_call_operand.hbm [shape: f32[128,128], index: 1, kind: input, shape index: {}]
  %s2 = inlined_call_operand.vmem [shape: f32[1,128], index: 2, kind: input, shape index: {}]
  %s3 = inlined_call_operand.hbm [shape: f32[8,128], index: 3, kind: output, shape index: {}]
  %s4 = sld [smem:[#allocation0]]
  $region30: #{tpu_custom_call.1} parent=0
    _
  %s6 = ssub.s32 1, %s4
  %s7 = scalar_select 0, %s6, %s4
  $region1: #{tpu_custom_call.1} parent=0
    #allocation2 [shape = 'u8[4096]{0}', space=vmem, size = 0x1000, scoped, tag = 'input window, operand 0, single buffered']
    #allocation3 [shape = 's32[1]{0}', space=sflag, size = 0x4, scoped, tag = 'scoped memory for tpu_custom_call.1']
    #allocation4 [shape = 's32[1]{0}', space=sflag, size = 0x4, scoped, tag = 'scoped memory for tpu_custom_call.1']
    #allocation5 [shape = 'u8[65536]{0}', space=vmem, size = 0x10000, scoped, tag = 'input window, operand 1, single buffered']
    #allocation6 [shape = 's32[1]{0}', space=sflag, size = 0x4, scoped, tag = 'scoped memory for tpu_custom_call.1']
    #allocation7 [shape = 'u8[4096]{0}', space=vmem, size = 0x1000, scoped, tag = 'output window, operand 0, single buffered']
    %8 = vsyncpa [#allocation3], 0
    %9 = vsyncpa [#allocation6], 0
    %10 = vsyncpa [#allocation4], 0
    // Predicated region
    $region2: #{tpu_custom_call.1} parent=1 // pred_check
      _
    $region3: #{tpu_custom_call.1} parent=1 // pred_check_branch
      %12 = sbr.rel (0) target = $region5
    $region4: #{tpu_custom_call.1} parent=1 // pred_region
      %s14 = ssub.s32 128, 128
      %15 = vsyncadd [#allocation3], %s14
      %s17 = sshll.u32 [#allocation2], 4
      %s18 = int_to_ptr.vmem [resolvable:$true] %s17
      %20 = dma.hbm_to_vmem [thread:$0]  %s0, 128, %s18, [#allocation3]
    $region5: #{tpu_custom_call.1} parent=1 // pred_fallthru
      _
    // Predicated region
    $region6: #{tpu_custom_call.1} parent=1 // pred_check
      _
    $region7: #{tpu_custom_call.1} parent=1 // pred_check_branch
      %22 = sbr.rel (0) target = $region9
    $region8: #{tpu_custom_call.1} parent=1 // pred_region
      %s24 = ssub.s32 2048, 2048
      %25 = vsyncadd [#allocation6], %s24
      %s26 = sshll.u32 [#allocation5], 4
      %s27 = int_to_ptr.vmem [resolvable:$true] %s26
      %32 = dma.hbm_to_vmem [thread:$0]  %s1, 2048, %s27, [#allocation6], 128, 128, 8
    $region9: #{tpu_custom_call.1} parent=1 // pred_fallthru
      _
    // Predicated region
    $region10: #{tpu_custom_call.1} parent=1 // pred_check
      _
    $region11: #{tpu_custom_call.1} parent=1 // pred_check_branch
      %34 = sbr.rel (0) target = $region13
    $region12: #{tpu_custom_call.1} parent=1 // pred_region
      _
    $region13: #{tpu_custom_call.1} parent=1 // pred_fallthru
      _
    // Predicated region
    $region14: #{tpu_custom_call.1} parent=1 // pred_check
      _
    $region15: #{tpu_custom_call.1} parent=1 // pred_check_branch
      %36 = sbr.rel (0) target = $region17
    $region16: #{tpu_custom_call.1} parent=1 // pred_region
      %37 = dma.done [#allocation3], 128
    $region17: #{tpu_custom_call.1} parent=1 // pred_fallthru
      _
    // Predicated region
    $region18: #{tpu_custom_call.1} parent=1 // pred_check
      _
    $region19: #{tpu_custom_call.1} parent=1 // pred_check_branch
      %39 = sbr.rel (0) target = $region21
    $region20: #{tpu_custom_call.1} parent=1 // pred_region
      %40 = dma.done [#allocation6], 2048
    $region21: #{tpu_custom_call.1} parent=1 // pred_fallthru
      _
    %v41 = vld [vmem:[#allocation2] sm:$0xff]
    %v42 = vld [vmem:[#allocation5] sm:$0xff]
    %v43 = vld [vmem:[#allocation5 + $0x8] sm:$0xff]
    %v44 = vld [vmem:[#allocation5 + $0x10] sm:$0xff]
    %v45 = vld [vmem:[#allocation5 + $0x18] sm:$0xff]
    %v46 = vld [vmem:[#allocation5 + $0x20] sm:$0xff]
    %v47 = vld [vmem:[#allocation5 + $0x28] sm:$0xff]
    %v48 = vld [vmem:[#allocation5 + $0x30] sm:$0xff]
    %v49 = vld [vmem:[#allocation5 + $0x38] sm:$0xff]
    %v50 = vld [vmem:[#allocation5 + $0x40] sm:$0xff]
    %v51 = vld [vmem:[#allocation5 + $0x48] sm:$0xff]
    %v52 = vld [vmem:[#allocation5 + $0x50] sm:$0xff]
    %v53 = vld [vmem:[#allocation5 + $0x58] sm:$0xff]
    %v54 = vld [vmem:[#allocation5 + $0x60] sm:$0xff]
    %v55 = vld [vmem:[#allocation5 + $0x68] sm:$0xff]
    %v56 = vld [vmem:[#allocation5 + $0x70] sm:$0xff]
    %v57 = vld [vmem:[#allocation5 + $0x78] sm:$0xff]
    %v58 = vld [vmem:[%s2] sm:$0x1]
    %v60 = vlaneseq
    %v61 = vshrl.u32 %v60, 7
    %v62 = vsub.s32 0, %v61
    %v63 = vrot.slane %v58, %v62
    %65 = vmatprep.subr.mxu0 0.0
    %66 = vmatpush1.msra.mxu0 %v57
    %67 = vmatprep.subr.mxu0 0.0
    %68 = vmatpush1.msra.mxu0 %v56
    %69 = vmatprep.subr.mxu0 0.0
    %70 = vmatpush1.msra.mxu0 %v55
    %71 = vmatprep.subr.mxu0 0.0
    %72 = vmatpush1.msra.mxu0 %v54
    %73 = vmatprep.subr.mxu0 0.0
    %74 = vmatpush1.msra.mxu0 %v53
    %75 = vmatprep.subr.mxu0 0.0
    %76 = vmatpush1.msra.mxu0 %v52
    %77 = vmatprep.subr.mxu0 0.0
    %78 = vmatpush1.msra.mxu0 %v51
    %79 = vmatprep.subr.mxu0 0.0
    %80 = vmatpush1.msra.mxu0 %v50
    %81 = vmatprep.subr.mxu0 0.0
    %82 = vmatpush1.msra.mxu0 %v49
    %83 = vmatprep.subr.mxu0 0.0
    %84 = vmatpush1.msra.mxu0 %v48
    %85 = vmatprep.subr.mxu0 0.0
    %86 = vmatpush1.msra.mxu0 %v47
    %87 = vmatprep.subr.mxu0 0.0
    %88 = vmatpush1.msra.mxu0 %v46
    %89 = vmatprep.subr.mxu0 0.0
    %90 = vmatpush1.msra.mxu0 %v45
    %91 = vmatprep.subr.mxu0 0.0
    %92 = vmatpush1.msra.mxu0 %v44
    %93 = vmatprep.subr.mxu0 0.0
    %94 = vmatpush1.msra.mxu0 %v43
    %95 = vmatprep.subr.mxu0 0.0
    %96 = vmatpush1.msra.mxu0 %v42
    %97 = vmatprep.subr.mxu0 0.0
    %98 = vmatpush2.msra.mxu0 0.0
    %99 = vmatprep.subr.mxu0 0.0
    %100 = vmatpush2.msra.mxu0 0.0
    %101 = vmatprep.subr.mxu0 0.0
    %102 = vmatpush2.msra.mxu0 0.0
    %103 = vmatprep.subr.mxu0 0.0
    %104 = vmatpush2.msra.mxu0 0.0
    %105 = vmatprep.subr.mxu0 0.0
    %106 = vmatpush2.msra.mxu0 0.0
    %107 = vmatprep.subr.mxu0 0.0
    %108 = vmatpush2.msra.mxu0 0.0
    %109 = vmatprep.subr.mxu0 0.0
    %110 = vmatpush2.msra.mxu0 0.0
    %111 = vmatprep.subr.mxu0 0.0
    %112 = vmatpush2.msra.mxu0 0.0
    %113 = vmatprep.subr.mxu0 0.0
    %114 = vmatpush2.msra.mxu0 0.0
    %115 = vmatprep.subr.mxu0 0.0
    %116 = vmatpush2.msra.mxu0 0.0
    %117 = vmatprep.subr.mxu0 0.0
    %118 = vmatpush2.msra.mxu0 0.0
    %119 = vmatprep.subr.mxu0 0.0
    %120 = vmatpush2.msra.mxu0 0.0
    %121 = vmatprep.subr.mxu0 0.0
    %122 = vmatpush2.msra.mxu0 0.0
    %123 = vmatprep.subr.mxu0 0.0
    %124 = vmatpush2.msra.mxu0 0.0
    %125 = vmatprep.subr.mxu0 0.0
    %126 = vmatpush2.msra.mxu0 0.0
    %127 = vmatprep.subr.mxu0 0.0
    %128 = vmatpush2.msra.mxu0 0.0
    %129 = vmatprep.mubr.f32.mxu0 0.0
    %130 = vmatmul.mubr.f32.gmra.mxu0 %v41
    %v131 = vpop.f32.mrf.mxu0
    %v132 = vadd.f32 %v63, %v131
    %v133 = vpop.f32.mrf.mxu0
    %134 = vdwg.mxu0
    %135 = vst [vmem:[#allocation7] sm:$0xff] %v132
    // Predicated region
    $region22: #{tpu_custom_call.1} parent=1 // pred_check
      _
    $region23: #{tpu_custom_call.1} parent=1 // pred_check_branch
      %137 = sbr.rel (0) target = $region25
    $region24: #{tpu_custom_call.1} parent=1 // pred_region
      %s139 = ssub.s32 128, 128
      %140 = vsyncadd [#allocation4], %s139
      %s142 = sshll.u32 [#allocation7], 4
      %s143 = int_to_ptr.vmem [resolvable:$true] %s142
      %145 = dma.vmem_to_hbm [thread:$0]  %s143, 128, %s3, [#allocation4]
    $region25: #{tpu_custom_call.1} parent=1 // pred_fallthru
      _
    // Predicated region
    $region26: #{tpu_custom_call.1} parent=1 // pred_check
      _
    $region27: #{tpu_custom_call.1} parent=1 // pred_check_branch
      %147 = sbr.rel (0) target = $region29
    $region28: #{tpu_custom_call.1} parent=1 // pred_region
      %148 = dma.done [#allocation4], 128
    $region29: #{tpu_custom_call.1} parent=1 // pred_fallthru
      _
    %149 = vsyncpa [#allocation3], 1
    %150 = vsyncpa [#allocation6], 1
    %151 = vsyncpa [#allocation4], 1

</llo_original>
